<compile_context>
chip_gen: v7x
topology: tpu7x:2x2x1
jax: 0.10.0
libtpu: 0.0.40
codegen_flags: <defaults>
</compile_context>

<pallas_src>
import functools

import jax
import jax.numpy as jnp
from jax.experimental import pallas as pl
from jax.experimental.pallas import tpu as pltpu


# ---------------------------------------------------------------------------
# Homological structure (deterministic: a single tetrahedron on 4 nodes)
# ---------------------------------------------------------------------------
# edges: e0=(0,1) e1=(0,2) e2=(0,3) e3=(1,2) e4=(1,3) e5=(2,3)
NODES_TO_EDGES = (
    [0, 1, 0, 2, 0, 3, 1, 2, 1, 3, 2, 3],   # node (input) indices
    [0, 0, 1, 1, 2, 2, 3, 3, 4, 4, 5, 5],   # edge (output) indices
)
# triangles: t0=(e0,e1,e3) t1=(e0,e2,e4) t2=(e1,e2,e5) t3=(e3,e4,e5)
EDGES_TO_TRIANGLES = (
    [0, 1, 3, 0, 2, 4, 1, 2, 5, 3, 4, 5],   # edge (input) indices
    [0, 0, 0, 1, 1, 1, 2, 2, 2, 3, 3, 3],   # triangle (output) indices
)
# one tetrahedron containing all 4 triangles
TRIANGLES_TO_TETRAHEDRA = (
    [0, 1, 2, 3],                            # triangle (input) indices
    [0, 0, 0, 0],                            # tetrahedron (output) indices
)

NUM_NODES = max(NODES_TO_EDGES[0]) + 1                # 4
NUM_EDGES = max(EDGES_TO_TRIANGLES[0]) + 1            # 6
NUM_TRIANGLES = max(TRIANGLES_TO_TETRAHEDRA[0]) + 1   # 4
NUM_TETRAHEDRA = max(TRIANGLES_TO_TETRAHEDRA[1]) + 1  # 1
OUT_DIM = NUM_EDGES + NUM_TRIANGLES + NUM_TETRAHEDRA  # 11

# Sublane-groups (rows of 128 lanes) per grid step -> 256*128 = 32768 batch
# elements per step.  Multiple of 8; sweepable.
TILE_S = 256


def _per_output_terms(conn):
    """For each output unit, the list of (nnz_index, input_index) terms."""
    in_idx, out_idx = conn
    n_out = max(out_idx) + 1
    terms = [[] for _ in range(n_out)]
    for k, (i, o) in enumerate(zip(in_idx, out_idx)):
        terms[o].append((k, i))
    return terms


EDGE_TERMS = _per_output_terms(NODES_TO_EDGES)          # 6 outputs, 2 terms each
TRI_TERMS = _per_output_terms(EDGES_TO_TRIANGLES)       # 4 outputs, 3 terms each
TET_TERMS = _per_output_terms(TRIANGLES_TO_TETRAHEDRA)  # 1 output, 4 terms


def _round_up(x, m):
    return ((x + m - 1) // m) * m


# ---------------------------------------------------------------------------
# Pallas kernel
# ---------------------------------------------------------------------------
def _sparse_layer_tiles(in_tiles, terms, w_ref, b_ref):
    """relu(SparseLinear(x)): scalar-weight * dense (TILE_S, 128) VPU FMAs."""
    out_tiles = []
    for o, tlist in enumerate(terms):
        if not tlist:
            acc = jnp.zeros_like(in_tiles[0])
        else:
            k0, i0 = tlist[0]
            acc = w_ref[k0] * in_tiles[i0]
            for k, i in tlist[1:]:
                acc = acc + w_ref[k] * in_tiles[i]
        out_tiles.append(jnp.maximum(acc + b_ref[o], 0.0))
    return out_tiles


def hnn_kernel(x_ref, w1_ref, b1_ref, w2_ref, b2_ref, w3_ref, b3_ref, out_ref):
    # x_ref:   [NUM_NODES, TILE_S, 128]  (VMEM, dense sublane x lane packing)
    # w*_ref:  flat nonzero weight values (SMEM); b*_ref: biases (SMEM)
    # out_ref: [OUT_DIM, TILE_S, 128]    (VMEM)
    x_tiles = [x_ref[i] for i in range(NUM_NODES)]            # each (TILE_S, 128)

    e_tiles = _sparse_layer_tiles(x_tiles, EDGE_TERMS, w1_ref, b1_ref)  # relu(edges)
    t_tiles = _sparse_layer_tiles(e_tiles, TRI_TERMS, w2_ref, b2_ref)   # relu(triangles)
    k_tiles = _sparse_layer_tiles(t_tiles, TET_TERMS, w3_ref, b3_ref)   # relu(tetrahedra)

    # torch.cat([x_s1, x_s2, x_s3], dim=1): store each activation tile directly
    # (full-width, unmasked stores; no concatenate / sublane repacking).
    for o, tile in enumerate(e_tiles + t_tiles + k_tiles):
        out_ref[o] = tile


# ---------------------------------------------------------------------------
# Wrapper
# ---------------------------------------------------------------------------
@functools.partial(jax.jit, static_argnames=("tile_s",))
def hnn_forward(x, w1_vals, b1, w2_vals, b2, w3_vals, b3, *, tile_s=TILE_S):
    """x: [B, num_nodes] f32 -> [B, OUT_DIM] f32 (matches the PyTorch forward)."""
    batch = x.shape[0]
    assert x.shape[1] == NUM_NODES

    # Pack the batch onto sublanes (groups of 128) and lanes (128 wide).
    n128 = pl.cdiv(batch, 128)                      # number of 128-lane groups
    tile_s_eff = _round_up(min(tile_s, _round_up(n128, 8)), 8)
    assert tile_s_eff >= 8 and tile_s_eff % 8 == 0  # (8, 128) block constraint
    n128_pad = _round_up(n128, tile_s_eff)
    b_pad = n128_pad * 128
    n_tiles = n128_pad // tile_s_eff

    # Feature-major, lane-dense layout: [NUM_NODES, n128_pad, 128].
    xt = (jnp.zeros((NUM_NODES, b_pad), jnp.float32)
          .at[:, :batch].set(x.astype(jnp.float32).T)
          .reshape(NUM_NODES, n128_pad, 128))

    # Only needed for very large tiles (double-buffered in/out blocks); the
    # default (256) uses ~4 MiB, well inside every generation's default limit.
    block_bytes = 4 * (NUM_NODES + OUT_DIM) * tile_s_eff * 128
    vmem_limit = None
    if 2 * block_bytes > 12 * 1024 * 1024:
        vmem_limit = min(2 * block_bytes + (8 << 20), 48 << 20)

    smem = pl.BlockSpec(memory_space=pltpu.MemorySpace.SMEM)
    out_packed = pl.pallas_call(
        hnn_kernel,
        out_shape=jax.ShapeDtypeStruct((OUT_DIM, n128_pad, 128), jnp.float32),
        grid=(n_tiles,),
        in_specs=[
            pl.BlockSpec((NUM_NODES, tile_s_eff, 128), lambda i: (0, i, 0)),
            smem, smem,   # w1_vals, b1
            smem, smem,   # w2_vals, b2
            smem, smem,   # w3_vals, b3
        ],
        out_specs=pl.BlockSpec((OUT_DIM, tile_s_eff, 128), lambda i: (0, i, 0)),
        compiler_params=pltpu.CompilerParams(
            dimension_semantics=("parallel",),
            vmem_limit_bytes=vmem_limit,
        ),
    )(xt, w1_vals, b1, w2_vals, b2, w3_vals, b3)

    # Boundary conversion back to the PyTorch [batch, features] interface.
    return out_packed.reshape(OUT_DIM, b_pad)[:, :batch].T


# ---------------------------------------------------------------------------
# Parameter construction + pure-JAX reference
# ---------------------------------------------------------------------------
def make_sparse_weight(key, in_features, out_features, conn):
    """Returns (flat nnz values, bias, dense [out,in] weight for reference)."""
    in_idx, out_idx = conn
    kw, kb = jax.random.split(key)
    nnz = len(in_idx)
    vals = jax.random.normal(kw, (nnz,), dtype=jnp.float32) * 0.5
    b = jax.random.normal(kb, (out_features,), dtype=jnp.float32) * 0.1
    w_dense = jnp.zeros((out_features, in_features), jnp.float32).at[
        jnp.asarray(out_idx), jnp.asarray(in_idx)].set(vals)
    return vals, b, w_dense


def hnn_reference(x, w1, b1, w2, b2, w3, b3):
    x1 = jax.nn.relu(x @ w1.T + b1)
    x2 = jax.nn.relu(x1 @ w2.T + b2)
    x3 = jax.nn.relu(x2 @ w3.T + b3)
    return jnp.concatenate([x1, x2, x3], axis=1)


if __name__ == "__main__":
    key = jax.random.PRNGKey(0)
    k_x, k_w1, k_w2, k_w3 = jax.random.split(key, 4)

    batch = 200  # pads to 1024 packed lanes (exercises the padding path)
    x = jax.random.normal(k_x, (batch, NUM_NODES), dtype=jnp.float32)

    w1_vals, b1, w1 = make_sparse_weight(k_w1, NUM_NODES, NUM_EDGES, NODES_TO_EDGES)
    w2_vals, b2, w2 = make_sparse_weight(k_w2, NUM_EDGES, NUM_TRIANGLES, EDGES_TO_TRIANGLES)
    w3_vals, b3, w3 = make_sparse_weight(
        k_w3, NUM_TRIANGLES, NUM_TETRAHEDRA, TRIANGLES_TO_TETRAHEDRA)

    out = hnn_forward(x, w1_vals, b1, w2_vals, b2, w3_vals, b3)
    out = jax.block_until_ready(out)

    ref = hnn_reference(x, w1, b1, w2, b2, w3, b3)
    assert out.shape == (batch, OUT_DIM)
    assert jnp.allclose(out, ref, atol=1e-5, rtol=1e-5), "mismatch vs reference"

    print("KERNEL_OK")
</pallas_src>

<mosaic_0001>
module attributes {stable_mosaic.version = 11 : i64} {
  func.func @hnn_kernel(%arg0: i32, %arg1: memref<4x8x128xf32, #tpu.memory_space<vmem>>, %arg2: memref<12xf32, #tpu.memory_space<smem>>, %arg3: memref<6xf32, #tpu.memory_space<smem>>, %arg4: memref<12xf32, #tpu.memory_space<smem>>, %arg5: memref<4xf32, #tpu.memory_space<smem>>, %arg6: memref<4xf32, #tpu.memory_space<smem>>, %arg7: memref<1xf32, #tpu.memory_space<smem>>, %arg8: memref<11x8x128xf32, #tpu.memory_space<vmem>>) attributes {dimension_semantics = [#tpu.dimension_semantics<parallel>], iteration_bounds = array<i64: 1>, scalar_prefetch = 0 : i64, scratch_operands = 0 : i64, tpu.core_type = #tpu.core_type<tc>, window_params = [{transform_indices = @transform_0, window_bounds = array<i64: 4, 8, 128>}, {transform_indices = @transform_1, window_bounds = array<i64: 12>}, {transform_indices = @transform_2, window_bounds = array<i64: 6>}, {transform_indices = @transform_3, window_bounds = array<i64: 12>}, {transform_indices = @transform_4, window_bounds = array<i64: 4>}, {transform_indices = @transform_5, window_bounds = array<i64: 4>}, {transform_indices = @transform_6, window_bounds = array<i64: 1>}, {transform_indices = @transform_7, window_bounds = array<i64: 11, 8, 128>}]} {
    %c0 = arith.constant 0 : index
    %c0_0 = arith.constant 0 : index
    %c0_1 = arith.constant 0 : index
    %0 = vector.load %arg1[%c0, %c0_0, %c0_1] : memref<4x8x128xf32, #tpu.memory_space<vmem>>, vector<1x8x128xf32>
    %1 = vector.shape_cast %0 : vector<1x8x128xf32> to vector<8x128xf32>
    %c1 = arith.constant 1 : index
    %c0_2 = arith.constant 0 : index
    %c0_3 = arith.constant 0 : index
    %2 = vector.load %arg1[%c1, %c0_2, %c0_3] : memref<4x8x128xf32, #tpu.memory_space<vmem>>, vector<1x8x128xf32>
    %3 = vector.shape_cast %2 : vector<1x8x128xf32> to vector<8x128xf32>
    %c2 = arith.constant 2 : index
    %c0_4 = arith.constant 0 : index
    %c0_5 = arith.constant 0 : index
    %4 = vector.load %arg1[%c2, %c0_4, %c0_5] : memref<4x8x128xf32, #tpu.memory_space<vmem>>, vector<1x8x128xf32>
    %5 = vector.shape_cast %4 : vector<1x8x128xf32> to vector<8x128xf32>
    %c3 = arith.constant 3 : index
    %c0_6 = arith.constant 0 : index
    %c0_7 = arith.constant 0 : index
    %6 = vector.load %arg1[%c3, %c0_6, %c0_7] : memref<4x8x128xf32, #tpu.memory_space<vmem>>, vector<1x8x128xf32>
    %7 = vector.shape_cast %6 : vector<1x8x128xf32> to vector<8x128xf32>
    %c0_8 = arith.constant 0 : index
    %8 = memref.load %arg2[%c0_8] : memref<12xf32, #tpu.memory_space<smem>>
    %9 = vector.broadcast %8 : f32 to vector<8x128xf32>
    %10 = arith.mulf %9, %1 : vector<8x128xf32>
    %c1_9 = arith.constant 1 : index
    %11 = memref.load %arg2[%c1_9] : memref<12xf32, #tpu.memory_space<smem>>
    %12 = vector.broadcast %11 : f32 to vector<8x128xf32>
    %13 = arith.mulf %12, %3 : vector<8x128xf32>
    %14 = arith.addf %10, %13 : vector<8x128xf32>
    %c0_10 = arith.constant 0 : index
    %15 = memref.load %arg3[%c0_10] : memref<6xf32, #tpu.memory_space<smem>>
    %16 = vector.broadcast %15 : f32 to vector<8x128xf32>
    %17 = arith.addf %14, %16 : vector<8x128xf32>
    %cst = arith.constant 0.000000e+00 : f32
    %18 = vector.broadcast %cst : f32 to vector<8x128xf32>
    %19 = arith.maximumf %17, %18 : vector<8x128xf32>
    %c2_11 = arith.constant 2 : index
    %20 = memref.load %arg2[%c2_11] : memref<12xf32, #tpu.memory_space<smem>>
    %21 = vector.broadcast %20 : f32 to vector<8x128xf32>
    %22 = arith.mulf %21, %1 : vector<8x128xf32>
    %c3_12 = arith.constant 3 : index
    %23 = memref.load %arg2[%c3_12] : memref<12xf32, #tpu.memory_space<smem>>
    %24 = vector.broadcast %23 : f32 to vector<8x128xf32>
    %25 = arith.mulf %24, %5 : vector<8x128xf32>
    %26 = arith.addf %22, %25 : vector<8x128xf32>
    %c1_13 = arith.constant 1 : index
    %27 = memref.load %arg3[%c1_13] : memref<6xf32, #tpu.memory_space<smem>>
    %28 = vector.broadcast %27 : f32 to vector<8x128xf32>
    %29 = arith.addf %26, %28 : vector<8x128xf32>
    %cst_14 = arith.constant 0.000000e+00 : f32
    %30 = vector.broadcast %cst_14 : f32 to vector<8x128xf32>
    %31 = arith.maximumf %29, %30 : vector<8x128xf32>
    %c4 = arith.constant 4 : index
    %32 = memref.load %arg2[%c4] : memref<12xf32, #tpu.memory_space<smem>>
    %33 = vector.broadcast %32 : f32 to vector<8x128xf32>
    %34 = arith.mulf %33, %1 : vector<8x128xf32>
    %c5 = arith.constant 5 : index
    %35 = memref.load %arg2[%c5] : memref<12xf32, #tpu.memory_space<smem>>
    %36 = vector.broadcast %35 : f32 to vector<8x128xf32>
    %37 = arith.mulf %36, %7 : vector<8x128xf32>
    %38 = arith.addf %34, %37 : vector<8x128xf32>
    %c2_15 = arith.constant 2 : index
    %39 = memref.load %arg3[%c2_15] : memref<6xf32, #tpu.memory_space<smem>>
    %40 = vector.broadcast %39 : f32 to vector<8x128xf32>
    %41 = arith.addf %38, %40 : vector<8x128xf32>
    %cst_16 = arith.constant 0.000000e+00 : f32
    %42 = vector.broadcast %cst_16 : f32 to vector<8x128xf32>
    %43 = arith.maximumf %41, %42 : vector<8x128xf32>
    %c6 = arith.constant 6 : index
    %44 = memref.load %arg2[%c6] : memref<12xf32, #tpu.memory_space<smem>>
    %45 = vector.broadcast %44 : f32 to vector<8x128xf32>
    %46 = arith.mulf %45, %3 : vector<8x128xf32>
    %c7 = arith.constant 7 : index
    %47 = memref.load %arg2[%c7] : memref<12xf32, #tpu.memory_space<smem>>
    %48 = vector.broadcast %47 : f32 to vector<8x128xf32>
    %49 = arith.mulf %48, %5 : vector<8x128xf32>
    %50 = arith.addf %46, %49 : vector<8x128xf32>
    %c3_17 = arith.constant 3 : index
    %51 = memref.load %arg3[%c3_17] : memref<6xf32, #tpu.memory_space<smem>>
    %52 = vector.broadcast %51 : f32 to vector<8x128xf32>
    %53 = arith.addf %50, %52 : vector<8x128xf32>
    %cst_18 = arith.constant 0.000000e+00 : f32
    %54 = vector.broadcast %cst_18 : f32 to vector<8x128xf32>
    %55 = arith.maximumf %53, %54 : vector<8x128xf32>
    %c8 = arith.constant 8 : index
    %56 = memref.load %arg2[%c8] : memref<12xf32, #tpu.memory_space<smem>>
    %57 = vector.broadcast %56 : f32 to vector<8x128xf32>
    %58 = arith.mulf %57, %3 : vector<8x128xf32>
    %c9 = arith.constant 9 : index
    %59 = memref.load %arg2[%c9] : memref<12xf32, #tpu.memory_space<smem>>
    %60 = vector.broadcast %59 : f32 to vector<8x128xf32>
    %61 = arith.mulf %60, %7 : vector<8x128xf32>
    %62 = arith.addf %58, %61 : vector<8x128xf32>
    %c4_19 = arith.constant 4 : index
    %63 = memref.load %arg3[%c4_19] : memref<6xf32, #tpu.memory_space<smem>>
    %64 = vector.broadcast %63 : f32 to vector<8x128xf32>
    %65 = arith.addf %62, %64 : vector<8x128xf32>
    %cst_20 = arith.constant 0.000000e+00 : f32
    %66 = vector.broadcast %cst_20 : f32 to vector<8x128xf32>
    %67 = arith.maximumf %65, %66 : vector<8x128xf32>
    %c10 = arith.constant 10 : index
    %68 = memref.load %arg2[%c10] : memref<12xf32, #tpu.memory_space<smem>>
    %69 = vector.broadcast %68 : f32 to vector<8x128xf32>
    %70 = arith.mulf %69, %5 : vector<8x128xf32>
    %c11 = arith.constant 11 : index
    %71 = memref.load %arg2[%c11] : memref<12xf32, #tpu.memory_space<smem>>
    %72 = vector.broadcast %71 : f32 to vector<8x128xf32>
    %73 = arith.mulf %72, %7 : vector<8x128xf32>
    %74 = arith.addf %70, %73 : vector<8x128xf32>
    %c5_21 = arith.constant 5 : index
    %75 = memref.load %arg3[%c5_21] : memref<6xf32, #tpu.memory_space<smem>>
    %76 = vector.broadcast %75 : f32 to vector<8x128xf32>
    %77 = arith.addf %74, %76 : vector<8x128xf32>
    %cst_22 = arith.constant 0.000000e+00 : f32
    %78 = vector.broadcast %cst_22 : f32 to vector<8x128xf32>
    %79 = arith.maximumf %77, %78 : vector<8x128xf32>
    %c0_23 = arith.constant 0 : index
    %80 = memref.load %arg4[%c0_23] : memref<12xf32, #tpu.memory_space<smem>>
    %81 = vector.broadcast %80 : f32 to vector<8x128xf32>
    %82 = arith.mulf %81, %19 : vector<8x128xf32>
    %c1_24 = arith.constant 1 : index
    %83 = memref.load %arg4[%c1_24] : memref<12xf32, #tpu.memory_space<smem>>
    %84 = vector.broadcast %83 : f32 to vector<8x128xf32>
    %85 = arith.mulf %84, %31 : vector<8x128xf32>
    %86 = arith.addf %82, %85 : vector<8x128xf32>
    %c2_25 = arith.constant 2 : index
    %87 = memref.load %arg4[%c2_25] : memref<12xf32, #tpu.memory_space<smem>>
    %88 = vector.broadcast %87 : f32 to vector<8x128xf32>
    %89 = arith.mulf %88, %55 : vector<8x128xf32>
    %90 = arith.addf %86, %89 : vector<8x128xf32>
    %c0_26 = arith.constant 0 : index
    %91 = memref.load %arg5[%c0_26] : memref<4xf32, #tpu.memory_space<smem>>
    %92 = vector.broadcast %91 : f32 to vector<8x128xf32>
    %93 = arith.addf %90, %92 : vector<8x128xf32>
    %cst_27 = arith.constant 0.000000e+00 : f32
    %94 = vector.broadcast %cst_27 : f32 to vector<8x128xf32>
    %95 = arith.maximumf %93, %94 : vector<8x128xf32>
    %c3_28 = arith.constant 3 : index
    %96 = memref.load %arg4[%c3_28] : memref<12xf32, #tpu.memory_space<smem>>
    %97 = vector.broadcast %96 : f32 to vector<8x128xf32>
    %98 = arith.mulf %97, %19 : vector<8x128xf32>
    %c4_29 = arith.constant 4 : index
    %99 = memref.load %arg4[%c4_29] : memref<12xf32, #tpu.memory_space<smem>>
    %100 = vector.broadcast %99 : f32 to vector<8x128xf32>
    %101 = arith.mulf %100, %43 : vector<8x128xf32>
    %102 = arith.addf %98, %101 : vector<8x128xf32>
    %c5_30 = arith.constant 5 : index
    %103 = memref.load %arg4[%c5_30] : memref<12xf32, #tpu.memory_space<smem>>
    %104 = vector.broadcast %103 : f32 to vector<8x128xf32>
    %105 = arith.mulf %104, %67 : vector<8x128xf32>
    %106 = arith.addf %102, %105 : vector<8x128xf32>
    %c1_31 = arith.constant 1 : index
    %107 = memref.load %arg5[%c1_31] : memref<4xf32, #tpu.memory_space<smem>>
    %108 = vector.broadcast %107 : f32 to vector<8x128xf32>
    %109 = arith.addf %106, %108 : vector<8x128xf32>
    %cst_32 = arith.constant 0.000000e+00 : f32
    %110 = vector.broadcast %cst_32 : f32 to vector<8x128xf32>
    %111 = arith.maximumf %109, %110 : vector<8x128xf32>
    %c6_33 = arith.constant 6 : index
    %112 = memref.load %arg4[%c6_33] : memref<12xf32, #tpu.memory_space<smem>>
    %113 = vector.broadcast %112 : f32 to vector<8x128xf32>
    %114 = arith.mulf %113, %31 : vector<8x128xf32>
    %c7_34 = arith.constant 7 : index
    %115 = memref.load %arg4[%c7_34] : memref<12xf32, #tpu.memory_space<smem>>
    %116 = vector.broadcast %115 : f32 to vector<8x128xf32>
    %117 = arith.mulf %116, %43 : vector<8x128xf32>
    %118 = arith.addf %114, %117 : vector<8x128xf32>
    %c8_35 = arith.constant 8 : index
    %119 = memref.load %arg4[%c8_35] : memref<12xf32, #tpu.memory_space<smem>>
    %120 = vector.broadcast %119 : f32 to vector<8x128xf32>
    %121 = arith.mulf %120, %79 : vector<8x128xf32>
    %122 = arith.addf %118, %121 : vector<8x128xf32>
    %c2_36 = arith.constant 2 : index
    %123 = memref.load %arg5[%c2_36] : memref<4xf32, #tpu.memory_space<smem>>
    %124 = vector.broadcast %123 : f32 to vector<8x128xf32>
    %125 = arith.addf %122, %124 : vector<8x128xf32>
    %cst_37 = arith.constant 0.000000e+00 : f32
    %126 = vector.broadcast %cst_37 : f32 to vector<8x128xf32>
    %127 = arith.maximumf %125, %126 : vector<8x128xf32>
    %c9_38 = arith.constant 9 : index
    %128 = memref.load %arg4[%c9_38] : memref<12xf32, #tpu.memory_space<smem>>
    %129 = vector.broadcast %128 : f32 to vector<8x128xf32>
    %130 = arith.mulf %129, %55 : vector<8x128xf32>
    %c10_39 = arith.constant 10 : index
    %131 = memref.load %arg4[%c10_39] : memref<12xf32, #tpu.memory_space<smem>>
    %132 = vector.broadcast %131 : f32 to vector<8x128xf32>
    %133 = arith.mulf %132, %67 : vector<8x128xf32>
    %134 = arith.addf %130, %133 : vector<8x128xf32>
    %c11_40 = arith.constant 11 : index
    %135 = memref.load %arg4[%c11_40] : memref<12xf32, #tpu.memory_space<smem>>
    %136 = vector.broadcast %135 : f32 to vector<8x128xf32>
    %137 = arith.mulf %136, %79 : vector<8x128xf32>
    %138 = arith.addf %134, %137 : vector<8x128xf32>
    %c3_41 = arith.constant 3 : index
    %139 = memref.load %arg5[%c3_41] : memref<4xf32, #tpu.memory_space<smem>>
    %140 = vector.broadcast %139 : f32 to vector<8x128xf32>
    %141 = arith.addf %138, %140 : vector<8x128xf32>
    %cst_42 = arith.constant 0.000000e+00 : f32
    %142 = vector.broadcast %cst_42 : f32 to vector<8x128xf32>
    %143 = arith.maximumf %141, %142 : vector<8x128xf32>
    %c0_43 = arith.constant 0 : index
    %144 = memref.load %arg6[%c0_43] : memref<4xf32, #tpu.memory_space<smem>>
    %145 = vector.broadcast %144 : f32 to vector<8x128xf32>
    %146 = arith.mulf %145, %95 : vector<8x128xf32>
    %c1_44 = arith.constant 1 : index
    %147 = memref.load %arg6[%c1_44] : memref<4xf32, #tpu.memory_space<smem>>
    %148 = vector.broadcast %147 : f32 to vector<8x128xf32>
    %149 = arith.mulf %148, %111 : vector<8x128xf32>
    %150 = arith.addf %146, %149 : vector<8x128xf32>
    %c2_45 = arith.constant 2 : index
    %151 = memref.load %arg6[%c2_45] : memref<4xf32, #tpu.memory_space<smem>>
    %152 = vector.broadcast %151 : f32 to vector<8x128xf32>
    %153 = arith.mulf %152, %127 : vector<8x128xf32>
    %154 = arith.addf %150, %153 : vector<8x128xf32>
    %c3_46 = arith.constant 3 : index
    %155 = memref.load %arg6[%c3_46] : memref<4xf32, #tpu.memory_space<smem>>
    %156 = vector.broadcast %155 : f32 to vector<8x128xf32>
    %157 = arith.mulf %156, %143 : vector<8x128xf32>
    %158 = arith.addf %154, %157 : vector<8x128xf32>
    %c0_47 = arith.constant 0 : index
    %159 = memref.load %arg7[%c0_47] : memref<1xf32, #tpu.memory_space<smem>>
    %160 = vector.broadcast %159 : f32 to vector<8x128xf32>
    %161 = arith.addf %158, %160 : vector<8x128xf32>
    %cst_48 = arith.constant 0.000000e+00 : f32
    %162 = vector.broadcast %cst_48 : f32 to vector<8x128xf32>
    %163 = arith.maximumf %161, %162 : vector<8x128xf32>
    %c0_49 = arith.constant 0 : index
    %c0_50 = arith.constant 0 : index
    %c0_51 = arith.constant 0 : index
    %164 = vector.load %arg8[%c0_49, %c0_50, %c0_51] : memref<11x8x128xf32, #tpu.memory_space<vmem>>, vector<1x8x128xf32>
    %165 = vector.shape_cast %164 : vector<1x8x128xf32> to vector<8x128xf32>
    %166 = vector.shape_cast %19 : vector<8x128xf32> to vector<1x8x128xf32>
    tpu.vector_store %arg8[%c0_49, %c0_50, %c0_51], %166 {strides = array<i32>} : memref<11x8x128xf32, #tpu.memory_space<vmem>>, vector<1x8x128xf32>,
    %c1_52 = arith.constant 1 : index
    %c0_53 = arith.constant 0 : index
    %c0_54 = arith.constant 0 : index
    %167 = vector.load %arg8[%c1_52, %c0_53, %c0_54] : memref<11x8x128xf32, #tpu.memory_space<vmem>>, vector<1x8x128xf32>
    %168 = vector.shape_cast %167 : vector<1x8x128xf32> to vector<8x128xf32>
    %169 = vector.shape_cast %31 : vector<8x128xf32> to vector<1x8x128xf32>
    tpu.vector_store %arg8[%c1_52, %c0_53, %c0_54], %169 {strides = array<i32>} : memref<11x8x128xf32, #tpu.memory_space<vmem>>, vector<1x8x128xf32>,
    %c2_55 = arith.constant 2 : index
    %c0_56 = arith.constant 0 : index
    %c0_57 = arith.constant 0 : index
    %170 = vector.load %arg8[%c2_55, %c0_56, %c0_57] : memref<11x8x128xf32, #tpu.memory_space<vmem>>, vector<1x8x128xf32>
    %171 = vector.shape_cast %170 : vector<1x8x128xf32> to vector<8x128xf32>
    %172 = vector.shape_cast %43 : vector<8x128xf32> to vector<1x8x128xf32>
    tpu.vector_store %arg8[%c2_55, %c0_56, %c0_57], %172 {strides = array<i32>} : memref<11x8x128xf32, #tpu.memory_space<vmem>>, vector<1x8x128xf32>,
    %c3_58 = arith.constant 3 : index
    %c0_59 = arith.constant 0 : index
    %c0_60 = arith.constant 0 : index
    %173 = vector.load %arg8[%c3_58, %c0_59, %c0_60] : memref<11x8x128xf32, #tpu.memory_space<vmem>>, vector<1x8x128xf32>
    %174 = vector.shape_cast %173 : vector<1x8x128xf32> to vector<8x128xf32>
    %175 = vector.shape_cast %55 : vector<8x128xf32> to vector<1x8x128xf32>
    tpu.vector_store %arg8[%c3_58, %c0_59, %c0_60], %175 {strides = array<i32>} : memref<11x8x128xf32, #tpu.memory_space<vmem>>, vector<1x8x128xf32>,
    %c4_61 = arith.constant 4 : index
    %c0_62 = arith.constant 0 : index
    %c0_63 = arith.constant 0 : index
    %176 = vector.load %arg8[%c4_61, %c0_62, %c0_63] : memref<11x8x128xf32, #tpu.memory_space<vmem>>, vector<1x8x128xf32>
    %177 = vector.shape_cast %176 : vector<1x8x128xf32> to vector<8x128xf32>
    %178 = vector.shape_cast %67 : vector<8x128xf32> to vector<1x8x128xf32>
    tpu.vector_store %arg8[%c4_61, %c0_62, %c0_63], %178 {strides = array<i32>} : memref<11x8x128xf32, #tpu.memory_space<vmem>>, vector<1x8x128xf32>,
    %c5_64 = arith.constant 5 : index
    %c0_65 = arith.constant 0 : index
    %c0_66 = arith.constant 0 : index
    %179 = vector.load %arg8[%c5_64, %c0_65, %c0_66] : memref<11x8x128xf32, #tpu.memory_space<vmem>>, vector<1x8x128xf32>
    %180 = vector.shape_cast %179 : vector<1x8x128xf32> to vector<8x128xf32>
    %181 = vector.shape_cast %79 : vector<8x128xf32> to vector<1x8x128xf32>
    tpu.vector_store %arg8[%c5_64, %c0_65, %c0_66], %181 {strides = array<i32>} : memref<11x8x128xf32, #tpu.memory_space<vmem>>, vector<1x8x128xf32>,
    %c6_67 = arith.constant 6 : index
    %c0_68 = arith.constant 0 : index
    %c0_69 = arith.constant 0 : index
    %182 = vector.load %arg8[%c6_67, %c0_68, %c0_69] : memref<11x8x128xf32, #tpu.memory_space<vmem>>, vector<1x8x128xf32>
    %183 = vector.shape_cast %182 : vector<1x8x128xf32> to vector<8x128xf32>
    %184 = vector.shape_cast %95 : vector<8x128xf32> to vector<1x8x128xf32>
    tpu.vector_store %arg8[%c6_67, %c0_68, %c0_69], %184 {strides = array<i32>} : memref<11x8x128xf32, #tpu.memory_space<vmem>>, vector<1x8x128xf32>,
    %c7_70 = arith.constant 7 : index
    %c0_71 = arith.constant 0 : index
    %c0_72 = arith.constant 0 : index
    %185 = vector.load %arg8[%c7_70, %c0_71, %c0_72] : memref<11x8x128xf32, #tpu.memory_space<vmem>>, vector<1x8x128xf32>
    %186 = vector.shape_cast %185 : vector<1x8x128xf32> to vector<8x128xf32>
    %187 = vector.shape_cast %111 : vector<8x128xf32> to vector<1x8x128xf32>
    tpu.vector_store %arg8[%c7_70, %c0_71, %c0_72], %187 {strides = array<i32>} : memref<11x8x128xf32, #tpu.memory_space<vmem>>, vector<1x8x128xf32>,
    %c8_73 = arith.constant 8 : index
    %c0_74 = arith.constant 0 : index
    %c0_75 = arith.constant 0 : index
    %188 = vector.load %arg8[%c8_73, %c0_74, %c0_75] : memref<11x8x128xf32, #tpu.memory_space<vmem>>, vector<1x8x128xf32>
    %189 = vector.shape_cast %188 : vector<1x8x128xf32> to vector<8x128xf32>
    %190 = vector.shape_cast %127 : vector<8x128xf32> to vector<1x8x128xf32>
    tpu.vector_store %arg8[%c8_73, %c0_74, %c0_75], %190 {strides = array<i32>} : memref<11x8x128xf32, #tpu.memory_space<vmem>>, vector<1x8x128xf32>,
    %c9_76 = arith.constant 9 : index
    %c0_77 = arith.constant 0 : index
    %c0_78 = arith.constant 0 : index
    %191 = vector.load %arg8[%c9_76, %c0_77, %c0_78] : memref<11x8x128xf32, #tpu.memory_space<vmem>>, vector<1x8x128xf32>
    %192 = vector.shape_cast %191 : vector<1x8x128xf32> to vector<8x128xf32>
    %193 = vector.shape_cast %143 : vector<8x128xf32> to vector<1x8x128xf32>
    tpu.vector_store %arg8[%c9_76, %c0_77, %c0_78], %193 {strides = array<i32>} : memref<11x8x128xf32, #tpu.memory_space<vmem>>, vector<1x8x128xf32>,
    %c10_79 = arith.constant 10 : index
    %c0_80 = arith.constant 0 : index
    %c0_81 = arith.constant 0 : index
    %194 = vector.load %arg8[%c10_79, %c0_80, %c0_81] : memref<11x8x128xf32, #tpu.memory_space<vmem>>, vector<1x8x128xf32>
    %195 = vector.shape_cast %194 : vector<1x8x128xf32> to vector<8x128xf32>
    %196 = vector.shape_cast %163 : vector<8x128xf32> to vector<1x8x128xf32>
    tpu.vector_store %arg8[%c10_79, %c0_80, %c0_81], %196 {strides = array<i32>} : memref<11x8x128xf32, #tpu.memory_space<vmem>>, vector<1x8x128xf32>,
    return
  }
  func.func @transform_0(%arg0: i32) -> (i32, i32, i32) {
    %c0_i32 = arith.constant 0 : i32
    %c0_i32_0 = arith.constant 0 : i32
    %c0_i32_1 = arith.constant 0 : i32
    return %c0_i32, %arg0, %c0_i32_0 : i32, i32, i32
  }
  func.func @transform_1(%arg0: i32) -> i32 {
    %c0_i32 = arith.constant 0 : i32
    %c0_i32_0 = arith.constant 0 : i32
    return %c0_i32 : i32
  }
  func.func @transform_2(%arg0: i32) -> i32 {
    %c0_i32 = arith.constant 0 : i32
    %c0_i32_0 = arith.constant 0 : i32
    return %c0_i32 : i32
  }
  func.func @transform_3(%arg0: i32) -> i32 {
    %c0_i32 = arith.constant 0 : i32
    %c0_i32_0 = arith.constant 0 : i32
    return %c0_i32 : i32
  }
  func.func @transform_4(%arg0: i32) -> i32 {
    %c0_i32 = arith.constant 0 : i32
    %c0_i32_0 = arith.constant 0 : i32
    return %c0_i32 : i32
  }
  func.func @transform_5(%arg0: i32) -> i32 {
    %c0_i32 = arith.constant 0 : i32
    %c0_i32_0 = arith.constant 0 : i32
    return %c0_i32 : i32
  }
  func.func @transform_6(%arg0: i32) -> i32 {
    %c0_i32 = arith.constant 0 : i32
    %c0_i32_0 = arith.constant 0 : i32
    return %c0_i32 : i32
  }
  func.func @transform_7(%arg0: i32) -> (i32, i32, i32) {
    %c0_i32 = arith.constant 0 : i32
    %c0_i32_0 = arith.constant 0 : i32
    %c0_i32_1 = arith.constant 0 : i32
    return %c0_i32, %arg0, %c0_i32_0 : i32, i32, i32
  }
}

</mosaic_0001>

<llo_original>
// kernel: hnn_forward.1
$region0: #{hnn_forward.1}
  #allocation0 [shape = 'u32[]', space=smem, size = 0x4, offset = 0x4, fixed_abs, tag = 'smem constant byte address 0x4 - core index']
  #allocation1 [shape = 'u32[144,128]{1,0:T(1,128)}', space=vmem, size = 0x12000, scoped, tag = 'internal scratch']
  #allocation2 [shape = 'f32[1]{0:T(128)S(6)}', space=smem, size = 0x200, scoped, tag = 'scoped memory for hnn_forward.1']
  %s0 = inlined_call_operand.vmem [shape: f32[4,8,128], index: 0, kind: input, shape index: {}]
  %s1 = inlined_call_operand.vmem [shape: f32[12], index: 1, kind: input, shape index: {}]
  %s2 = inlined_call_operand.vmem [shape: f32[6], index: 2, kind: input, shape index: {}]
  %s3 = inlined_call_operand.vmem [shape: f32[12], index: 3, kind: input, shape index: {}]
  %s4 = inlined_call_operand.vmem [shape: f32[4], index: 4, kind: input, shape index: {}]
  %s5 = inlined_call_operand.vmem [shape: f32[4], index: 5, kind: input, shape index: {}]
  %s6 = inlined_call_operand.<no memory space> [shape: f32[1], index: 6, kind: input, shape index: {}]
  %s7 = inlined_call_operand.vmem [shape: f32[11,8,128], index: 7, kind: output, shape index: {}]
  %s8 = sld [smem:[#allocation0]]
  $region58: #{hnn_forward.1} parent=0
    _
  %s10 = ssub.s32 1, %s8
  %s11 = scalar_select 0, %s10, %s8
  %12 = sst [smem:[#allocation2]] %s6
  $region1: #{hnn_forward.1} parent=0
    #allocation3 [shape = 'u8[512]{0}', space=smem, size = 0x200, scoped, tag = 'input window, operand 1, single buffered']
    #allocation4 [shape = 's32[1]{0}', space=sflag, size = 0x4, scoped, tag = 'scoped memory for hnn_forward.1']
    #allocation5 [shape = 'u8[512]{0}', space=smem, size = 0x200, scoped, tag = 'input window, operand 2, single buffered']
    #allocation6 [shape = 's32[1]{0}', space=sflag, size = 0x4, scoped, tag = 'scoped memory for hnn_forward.1']
    #allocation7 [shape = 'u8[512]{0}', space=smem, size = 0x200, scoped, tag = 'input window, operand 3, single buffered']
    #allocation8 [shape = 'u8[512]{0}', space=smem, size = 0x200, scoped, tag = 'input window, operand 4, single buffered']
    #allocation9 [shape = 's32[1]{0}', space=sflag, size = 0x4, scoped, tag = 'scoped memory for hnn_forward.1']
    #allocation10 [shape = 'u8[512]{0}', space=smem, size = 0x200, scoped, tag = 'input window, operand 5, single buffered']
    %13 = vsyncpa [#allocation4], 0
    %14 = vsyncpa [#allocation6], 0
    %15 = vsyncpa [#allocation9], 0
    // Predicated region
    $region2: #{hnn_forward.1} parent=1 // pred_check
      _
    $region3: #{hnn_forward.1} parent=1 // pred_check_branch
      %17 = sbr.rel (0) target = $region5
    $region4: #{hnn_forward.1} parent=1 // pred_region
      _
    $region5: #{hnn_forward.1} parent=1 // pred_fallthru
      _
    // Predicated region
    $region6: #{hnn_forward.1} parent=1 // pred_check
      _
    $region7: #{hnn_forward.1} parent=1 // pred_check_branch
      %19 = sbr.rel (0) target = $region9
    $region8: #{hnn_forward.1} parent=1 // pred_region
      %s21 = ssub.s32 16, 16
      %22 = vsyncadd [#allocation4], %s21
      %s24 = sshll.u32 %s1, 4
      %s25 = int_to_ptr.vmem [resolvable:$true] %s24
      %27 = dma.vmem_to_smem %s25, 16, [#allocation3], [#allocation4]
    $region9: #{hnn_forward.1} parent=1 // pred_fallthru
      _
    // Predicated region
    $region10: #{hnn_forward.1} parent=1 // pred_check
      _
    $region11: #{hnn_forward.1} parent=1 // pred_check_branch
      %29 = sbr.rel (0) target = $region13
    $region12: #{hnn_forward.1} parent=1 // pred_region
      %s31 = ssub.s32 16, 16
      %32 = vsyncadd [#allocation6], %s31
      %s34 = sshll.u32 %s2, 4
      %s35 = int_to_ptr.vmem [resolvable:$true] %s34
      %37 = dma.vmem_to_smem %s35, 16, [#allocation5], [#allocation6]
    $region13: #{hnn_forward.1} parent=1 // pred_fallthru
      _
    // Predicated region
    $region14: #{hnn_forward.1} parent=1 // pred_check
      _
    $region15: #{hnn_forward.1} parent=1 // pred_check_branch
      %39 = sbr.rel (0) target = $region17
    $region16: #{hnn_forward.1} parent=1 // pred_region
      %s41 = ssub.s32 16, 16
      %42 = vsyncadd [#allocation6], %s41
      %s44 = sshll.u32 %s3, 4
      %s45 = int_to_ptr.vmem [resolvable:$true] %s44
      %47 = dma.vmem_to_smem %s45, 16, [#allocation7], [#allocation6]
    $region17: #{hnn_forward.1} parent=1 // pred_fallthru
      _
    // Predicated region
    $region18: #{hnn_forward.1} parent=1 // pred_check
      _
    $region19: #{hnn_forward.1} parent=1 // pred_check_branch
      %49 = sbr.rel (0) target = $region21
    $region20: #{hnn_forward.1} parent=1 // pred_region
      %s51 = ssub.s32 16, 16
      %52 = vsyncadd [#allocation9], %s51
      %s54 = sshll.u32 %s4, 4
      %s55 = int_to_ptr.vmem [resolvable:$true] %s54
      %57 = dma.vmem_to_smem %s55, 16, [#allocation8], [#allocation9]
    $region21: #{hnn_forward.1} parent=1 // pred_fallthru
      _
    // Predicated region
    $region22: #{hnn_forward.1} parent=1 // pred_check
      _
    $region23: #{hnn_forward.1} parent=1 // pred_check_branch
      %59 = sbr.rel (0) target = $region25
    $region24: #{hnn_forward.1} parent=1 // pred_region
      %s61 = ssub.s32 16, 16
      %62 = vsyncadd [#allocation9], %s61
      %s64 = sshll.u32 %s5, 4
      %s65 = int_to_ptr.vmem [resolvable:$true] %s64
      %67 = dma.vmem_to_smem %s65, 16, [#allocation10], [#allocation9]
    $region25: #{hnn_forward.1} parent=1 // pred_fallthru
      _
    // Predicated region
    $region26: #{hnn_forward.1} parent=1 // pred_check
      _
    $region27: #{hnn_forward.1} parent=1 // pred_check_branch
      %69 = sbr.rel (0) target = $region29
    $region28: #{hnn_forward.1} parent=1 // pred_region
      _
    $region29: #{hnn_forward.1} parent=1 // pred_fallthru
      _
    // Predicated region
    $region30: #{hnn_forward.1} parent=1 // pred_check
      _
    $region31: #{hnn_forward.1} parent=1 // pred_check_branch
      %71 = sbr.rel (0) target = $region33
    $region32: #{hnn_forward.1} parent=1 // pred_region
      %72 = dma.done [#allocation4], 16
    $region33: #{hnn_forward.1} parent=1 // pred_fallthru
      _
    // Predicated region
    $region34: #{hnn_forward.1} parent=1 // pred_check
      _
    $region35: #{hnn_forward.1} parent=1 // pred_check_branch
      %74 = sbr.rel (0) target = $region37
    $region36: #{hnn_forward.1} parent=1 // pred_region
      %75 = dma.done [#allocation6], 16
    $region37: #{hnn_forward.1} parent=1 // pred_fallthru
      _
    // Predicated region
    $region38: #{hnn_forward.1} parent=1 // pred_check
      _
    $region39: #{hnn_forward.1} parent=1 // pred_check_branch
      %77 = sbr.rel (0) target = $region41
    $region40: #{hnn_forward.1} parent=1 // pred_region
      %78 = dma.done [#allocation6], 16
    $region41: #{hnn_forward.1} parent=1 // pred_fallthru
      _
    // Predicated region
    $region42: #{hnn_forward.1} parent=1 // pred_check
      _
    $region43: #{hnn_forward.1} parent=1 // pred_check_branch
      %80 = sbr.rel (0) target = $region45
    $region44: #{hnn_forward.1} parent=1 // pred_region
      %81 = dma.done [#allocation9], 16
    $region45: #{hnn_forward.1} parent=1 // pred_fallthru
      _
    // Predicated region
    $region46: #{hnn_forward.1} parent=1 // pred_check
      _
    $region47: #{hnn_forward.1} parent=1 // pred_check_branch
      %83 = sbr.rel (0) target = $region49
    $region48: #{hnn_forward.1} parent=1 // pred_region
      %84 = dma.done [#allocation9], 16
    $region49: #{hnn_forward.1} parent=1 // pred_fallthru
      _
    %85 = sfence
    %v86 = vld [vmem:[%s0] sm:$0xff]
    %s87 = scalar_lea.vmem %s0, 8
    %v88 = vld [vmem:[%s87] sm:$0xff]
    %s89 = scalar_lea.vmem %s0, 16
    %v90 = vld [vmem:[%s89] sm:$0xff]
    %s91 = scalar_lea.vmem %s0, 24
    %v92 = vld [vmem:[%s91] sm:$0xff]
    %s93 = sld [smem:[#allocation3]]
    %v94 = vstv %s93
    %v95 = vmul.f32 %v94, %v86
    %s96 = sld [smem:[#allocation3 + $0x1]]
    %v97 = vstv %s96
    %v98 = vmul.f32 %v97, %v88
    %v99 = vadd.f32 %v95, %v98
    %s100 = sld [smem:[#allocation5]]
    %v101 = vstv %s100
    %v102 = vadd.f32 %v99, %v101
    %v103 = vmax.f32 %v102, 0.0
    %s104 = sld [smem:[#allocation3 + $0x2]]
    %v105 = vstv %s104
    %v106 = vmul.f32 %v105, %v86
    %s107 = sld [smem:[#allocation3 + $0x3]]
    %v108 = vstv %s107
    %v109 = vmul.f32 %v108, %v90
    %v110 = vadd.f32 %v106, %v109
    %s111 = sld [smem:[#allocation5 + $0x1]]
    %v112 = vstv %s111
    %v113 = vadd.f32 %v110, %v112
    %v114 = vmax.f32 %v113, 0.0
    %s115 = sld [smem:[#allocation3 + $0x4]]
    %v116 = vstv %s115
    %v117 = vmul.f32 %v116, %v86
    %s118 = sld [smem:[#allocation3 + $0x5]]
    %v119 = vstv %s118
    %v120 = vmul.f32 %v119, %v92
    %v121 = vadd.f32 %v117, %v120
    %s122 = sld [smem:[#allocation5 + $0x2]]
    %v123 = vstv %s122
    %v124 = vadd.f32 %v121, %v123
    %v125 = vmax.f32 %v124, 0.0
    %s126 = sld [smem:[#allocation3 + $0x6]]
    %v127 = vstv %s126
    %v128 = vmul.f32 %v127, %v88
    %s129 = sld [smem:[#allocation3 + $0x7]]
    %v130 = vstv %s129
    %v131 = vmul.f32 %v130, %v90
    %v132 = vadd.f32 %v128, %v131
    %s133 = sld [smem:[#allocation5 + $0x3]]
    %v134 = vstv %s133
    %v135 = vadd.f32 %v132, %v134
    %v136 = vmax.f32 %v135, 0.0
    %s137 = sld [smem:[#allocation3 + $0x8]]
    %v138 = vstv %s137
    %v139 = vmul.f32 %v138, %v88
    %s140 = sld [smem:[#allocation3 + $0x9]]
    %v141 = vstv %s140
    %v142 = vmul.f32 %v141, %v92
    %v143 = vadd.f32 %v139, %v142
    %s144 = sld [smem:[#allocation5 + $0x4]]
    %v145 = vstv %s144
    %v146 = vadd.f32 %v143, %v145
    %v147 = vmax.f32 %v146, 0.0
    %s148 = sld [smem:[#allocation3 + $0xa]]
    %v149 = vstv %s148
    %v150 = vmul.f32 %v149, %v90
    %s151 = sld [smem:[#allocation3 + $0xb]]
    %v152 = vstv %s151
    %v153 = vmul.f32 %v152, %v92
    %v154 = vadd.f32 %v150, %v153
    %s155 = sld [smem:[#allocation5 + $0x5]]
    %v156 = vstv %s155
    %v157 = vadd.f32 %v154, %v156
    %v158 = vmax.f32 %v157, 0.0
    %s159 = sld [smem:[#allocation7]]
    %v160 = vstv %s159
    %v161 = vmul.f32 %v160, %v103
    %s162 = sld [smem:[#allocation7 + $0x1]]
    %v163 = vstv %s162
    %v164 = vmul.f32 %v163, %v114
    %v165 = vadd.f32 %v161, %v164
    %s166 = sld [smem:[#allocation7 + $0x2]]
    %v167 = vstv %s166
    %v168 = vmul.f32 %v167, %v136
    %v169 = vadd.f32 %v165, %v168
    %s170 = sld [smem:[#allocation8]]
    %v171 = vstv %s170
    %v172 = vadd.f32 %v169, %v171
    %v173 = vmax.f32 %v172, 0.0
    %s174 = sld [smem:[#allocation7 + $0x3]]
    %v175 = vstv %s174
    %v176 = vmul.f32 %v175, %v103
    %s177 = sld [smem:[#allocation7 + $0x4]]
    %v178 = vstv %s177
    %v179 = vmul.f32 %v178, %v125
    %v180 = vadd.f32 %v176, %v179
    %s181 = sld [smem:[#allocation7 + $0x5]]
    %v182 = vstv %s181
    %v183 = vmul.f32 %v182, %v147
    %v184 = vadd.f32 %v180, %v183
    %s185 = sld [smem:[#allocation8 + $0x1]]
    %v186 = vstv %s185
    %v187 = vadd.f32 %v184, %v186
    %v188 = vmax.f32 %v187, 0.0
    %s189 = sld [smem:[#allocation7 + $0x6]]
    %v190 = vstv %s189
    %v191 = vmul.f32 %v190, %v114
    %s192 = sld [smem:[#allocation7 + $0x7]]
    %v193 = vstv %s192
    %v194 = vmul.f32 %v193, %v125
    %v195 = vadd.f32 %v191, %v194
    %s196 = sld [smem:[#allocation7 + $0x8]]
    %v197 = vstv %s196
    %v198 = vmul.f32 %v197, %v158
    %v199 = vadd.f32 %v195, %v198
    %s200 = sld [smem:[#allocation8 + $0x2]]
    %v201 = vstv %s200
    %v202 = vadd.f32 %v199, %v201
    %v203 = vmax.f32 %v202, 0.0
    %s204 = sld [smem:[#allocation7 + $0x9]]
    %v205 = vstv %s204
    %v206 = vmul.f32 %v205, %v136
    %s207 = sld [smem:[#allocation7 + $0xa]]
    %v208 = vstv %s207
    %v209 = vmul.f32 %v208, %v147
    %v210 = vadd.f32 %v206, %v209
    %s211 = sld [smem:[#allocation7 + $0xb]]
    %v212 = vstv %s211
    %v213 = vmul.f32 %v212, %v158
    %v214 = vadd.f32 %v210, %v213
    %s215 = sld [smem:[#allocation8 + $0x3]]
    %v216 = vstv %s215
    %v217 = vadd.f32 %v214, %v216
    %v218 = vmax.f32 %v217, 0.0
    %s219 = sld [smem:[#allocation10]]
    %v220 = vstv %s219
    %v221 = vmul.f32 %v220, %v173
    %s222 = sld [smem:[#allocation10 + $0x1]]
    %v223 = vstv %s222
    %v224 = vmul.f32 %v223, %v188
    %v225 = vadd.f32 %v221, %v224
    %s226 = sld [smem:[#allocation10 + $0x2]]
    %v227 = vstv %s226
    %v228 = vmul.f32 %v227, %v203
    %v229 = vadd.f32 %v225, %v228
    %s230 = sld [smem:[#allocation10 + $0x3]]
    %v231 = vstv %s230
    %v232 = vmul.f32 %v231, %v218
    %v233 = vadd.f32 %v229, %v232
    %s234 = sld [smem:[#allocation2]]
    %v235 = vstv %s234
    %v236 = vadd.f32 %v233, %v235
    %v237 = vmax.f32 %v236, 0.0
    %238 = vst [vmem:[%s7] sm:$0xff] %v103
    %s239 = scalar_lea.vmem %s7, 8
    %240 = vst [vmem:[%s239] sm:$0xff] %v114
    %s241 = scalar_lea.vmem %s7, 16
    %242 = vst [vmem:[%s241] sm:$0xff] %v125
    %s243 = scalar_lea.vmem %s7, 24
    %244 = vst [vmem:[%s243] sm:$0xff] %v136
    %s245 = scalar_lea.vmem %s7, 32
    %246 = vst [vmem:[%s245] sm:$0xff] %v147
    %s247 = scalar_lea.vmem %s7, 40
    %248 = vst [vmem:[%s247] sm:$0xff] %v158
    %s249 = scalar_lea.vmem %s7, 48
    %250 = vst [vmem:[%s249] sm:$0xff] %v173
    %s251 = scalar_lea.vmem %s7, 56
    %252 = vst [vmem:[%s251] sm:$0xff] %v188
    %s253 = scalar_lea.vmem %s7, 64
    %254 = vst [vmem:[%s253] sm:$0xff] %v203
    %s255 = scalar_lea.vmem %s7, 72
    %256 = vst [vmem:[%s255] sm:$0xff] %v218
    %s257 = scalar_lea.vmem %s7, 80
    %258 = vst [vmem:[%s257] sm:$0xff] %v237
    // Predicated region
    $region50: #{hnn_forward.1} parent=1 // pred_check
      _
    $region51: #{hnn_forward.1} parent=1 // pred_check_branch
      %260 = sbr.rel (0) target = $region53
    $region52: #{hnn_forward.1} parent=1 // pred_region
      _
    $region53: #{hnn_forward.1} parent=1 // pred_fallthru
      _
    // Predicated region
    $region54: #{hnn_forward.1} parent=1 // pred_check
      _
    $region55: #{hnn_forward.1} parent=1 // pred_check_branch
      %262 = sbr.rel (0) target = $region57
    $region56: #{hnn_forward.1} parent=1 // pred_region
      _
    $region57: #{hnn_forward.1} parent=1 // pred_fallthru
      _
    %263 = vsyncpa [#allocation4], 1
    %264 = vsyncpa [#allocation6], 1
    %265 = vsyncpa [#allocation9], 1

</llo_original>
